<compile_context>
chip_gen: v5e
topology: v5e:2x2
jax: 0.10.0
libtpu: 0.0.40
codegen_flags: <defaults>
</compile_context>

<pallas_src>
import functools

import jax
import jax.numpy as jnp
from jax.experimental import pallas as pl
from jax.experimental.pallas import tpu as pltpu

_LANE = 128
_SUBLANE = 8
_MIB = 1024 * 1024


def _round_up(x, m):
    return (x + m - 1) // m * m


def _vmem_capacity_bytes():
    """Physical VMEM per TensorCore (128 MiB v5e/v6e, 64 MiB v7x)."""
    try:
        info = pltpu.get_tpu_info()
        cap = getattr(info, "vmem_capacity_bytes", None)
        if cap:
            return int(cap)
    except Exception:
        pass
    return 128 * _MIB


def _descending_tiles(full, quantum, cap=None):
    """Multiples of `quantum` that evenly divide `full`, descending, <= cap."""
    out = []
    n = full // quantum
    for d in range(n, 0, -1):
        if n % d == 0:
            t = d * quantum
            if cap is None or t <= cap:
                out.append(t)
    return out


def _tm_candidates(tm0):
    """Row-tile candidates: tm0, halving (8-aligned) down to 128 (or tm0)."""
    cands = []
    t = tm0
    while t >= _SUBLANE:
        cands.append(t)
        if t <= 128:
            break
        t = max(128, _round_up(t // 2, _SUBLANE))
    return cands


def _fit_tiles(m_rows, d_pad, h_pad, o_pad, block_m, block_h,
               in_bytes, out_bytes, budget):
    """Pick (tm, th, tn) fitting the VMEM budget.

    Preference: tn = o_pad first (no dense1 recompute), then the largest
    hidden tile, then the largest row tile.
    """
    tm0 = min(block_m, _round_up(m_rows, _SUBLANE))
    tm_cands = _tm_candidates(tm0)
    th_cands = _descending_tiles(h_pad, _LANE, cap=min(block_h, h_pad)) or [h_pad]
    tn_cands = _descending_tiles(o_pad, _LANE) or [o_pad]

    def footprint(tm, th, tn):
        # Double-buffered input/output tiles + fp32 accumulator + fp32 dense1
        # intermediate.
        b = 2 * in_bytes * (tm * d_pad + d_pad * th + h_pad + th * tn + o_pad)
        b += 2 * out_bytes * tm * tn
        b += 4 * tm * tn            # fp32 accumulator scratch
        b += 4 * tm * th            # fp32 relu(x@W1+b1) intermediate
        return b

    for tn in tn_cands:             # tn = o_pad first: dense1 computed once
        for th in th_cands:
            for tm in tm_cands:
                if footprint(tm, th, tn) <= budget:
                    return tm, th, tn
    return tm_cands[-1], th_cands[-1], tn_cands[-1]


def _ffn_kernel(x_ref, w1_ref, b1_ref, w2_ref, b2_ref, o_ref, acc_ref):
    # x_ref : (tm, D)    w1_ref: (D, th)    b1_ref: (1, H)  full width
    # w2_ref: (th, tn)   b2_ref: (1, O)     o_ref : (tm, tn)
    # acc_ref: (tm, tn) fp32 accumulator across the hidden (k) reduction axis.
    j = pl.program_id(1)
    k = pl.program_id(2)
    th = w1_ref.shape[1]
    tn = o_ref.shape[1]

    @pl.when(k == 0)
    def _():
        acc_ref[...] = jnp.zeros_like(acc_ref)

    # dense1 tile + bias + ReLU (MXU bf16 operands, fp32 accumulate).
    b1 = b1_ref[:, pl.ds(pl.multiple_of(k * th, _LANE), th)]
    h = jnp.dot(x_ref[...], w1_ref[...], preferred_element_type=jnp.float32)
    h = jnp.maximum(h + b1, 0.0)

    # dense2 partial product over this hidden tile, accumulated in fp32.
    acc_ref[...] += jnp.dot(h.astype(w2_ref.dtype), w2_ref[...],
                            preferred_element_type=jnp.float32)

    @pl.when(k == pl.num_programs(2) - 1)
    def _():
        b2 = b2_ref[:, pl.ds(pl.multiple_of(j * tn, _LANE), tn)]
        o_ref[...] = (acc_ref[...] + b2).astype(o_ref.dtype)


def prepare_ffn_params(w1, b1, w2, b2, *, block_h=512,
                       compute_dtype=jnp.bfloat16):
    """One-time parameter prep (call at init, NOT per forward pass).

    Converts PyTorch Linear layout (out_features, in_features) to (in, out),
    zero-pads D/O to multiples of 128 lanes and H to a multiple of the hidden
    tile (so the reduction tile never shrinks / never sees a partial block),
    and stores the weight matrices in the MXU compute dtype (bf16 by default).
    Biases stay fp32 (they are added to the fp32 accumulator).
    Returns ((w1_t, b1, w2_t, b2), out_dim).
    """
    assert block_h % _LANE == 0
    hidden, d_model = w1.shape
    out_dim, hidden2 = w2.shape
    assert hidden2 == hidden

    d_pad = _round_up(d_model, _LANE)
    h_quant = _LANE if hidden <= block_h else block_h
    h_pad = _round_up(hidden, h_quant)
    o_pad = _round_up(out_dim, _LANE)

    w1_t = jnp.pad(w1.T, ((0, d_pad - d_model), (0, h_pad - hidden)))
    w2_t = jnp.pad(w2.T, ((0, h_pad - hidden), (0, o_pad - out_dim)))
    b1_p = jnp.pad(b1, (0, h_pad - hidden)).reshape(1, h_pad)
    b2_p = jnp.pad(b2, (0, o_pad - out_dim)).reshape(1, o_pad)
    return (w1_t.astype(compute_dtype), b1_p.astype(jnp.float32),
            w2_t.astype(compute_dtype), b2_p.astype(jnp.float32)), out_dim


@functools.partial(jax.jit, static_argnames=("out_dim", "block_m", "block_h"))
def position_wise_ffn(x, w1_t, b1_p, w2_t, b2_p, *, out_dim,
                      block_m=512, block_h=512):
    """x: (..., d_model); weights pre-prepared via prepare_ffn_params."""
    orig_shape = x.shape
    d_model = orig_shape[-1]
    d_pad, h_pad = w1_t.shape
    _, o_pad = w2_t.shape
    compute_dtype = w1_t.dtype
    out_dtype = x.dtype

    x2d = x.reshape(-1, d_model)
    m = x2d.shape[0]

    in_bytes = jnp.dtype(compute_dtype).itemsize
    out_bytes = jnp.dtype(out_dtype).itemsize

    # Generation-aware VMEM budget (physical capacity minus headroom for
    # compiler-internal scratch): ~108 MiB on v5e/v6e, ~44 MiB on v7x.
    vmem_cap = _vmem_capacity_bytes()
    budget = max(32 * _MIB, vmem_cap - 20 * _MIB)

    tm, th, tn = _fit_tiles(m, d_pad, h_pad, o_pad, block_m, block_h,
                            in_bytes, out_bytes, budget)

    # v7x megacore: make sure the parallel grid axes have >= 2 iterations so
    # both TensorCores get work (single-TC chips are left alone so small-M
    # shapes don't re-stream weights for nothing).
    is_v7x_like = vmem_cap <= 96 * _MIB
    m_pad8 = _round_up(m, _SUBLANE)
    if (is_v7x_like and m_pad8 > _SUBLANE
            and (m_pad8 + tm - 1) // tm < 2 and o_pad // tn < 2):
        tm = max(_SUBLANE, _round_up(-(-m_pad8 // 2), _SUBLANE))

    # Pad rows to a multiple of tm (no undefined rows in the last block) and
    # feature dim to the padded weight layout; cast to the MXU compute dtype.
    m_pad = _round_up(m, tm)
    x2d = jnp.pad(x2d, ((0, m_pad - m), (0, d_pad - d_model))).astype(compute_dtype)

    grid = (m_pad // tm, o_pad // tn, h_pad // th)

    out = pl.pallas_call(
        _ffn_kernel,
        out_shape=jax.ShapeDtypeStruct((m_pad, o_pad), out_dtype),
        grid_spec=pltpu.PrefetchScalarGridSpec(
            num_scalar_prefetch=0,
            grid=grid,
            in_specs=[
                pl.BlockSpec((tm, d_pad), lambda i, j, k: (i, 0)),   # x rows
                pl.BlockSpec((d_pad, th), lambda i, j, k: (0, k)),   # W1^T tile
                pl.BlockSpec((1, h_pad),  lambda i, j, k: (0, 0)),   # b1 (full)
                pl.BlockSpec((th, tn),    lambda i, j, k: (k, j)),   # W2^T tile
                pl.BlockSpec((1, o_pad),  lambda i, j, k: (0, 0)),   # b2 (full)
            ],
            out_specs=pl.BlockSpec((tm, tn), lambda i, j, k: (i, j)),
            scratch_shapes=[pltpu.VMEM((tm, tn), jnp.float32)],
        ),
        compiler_params=pltpu.CompilerParams(
            dimension_semantics=("parallel", "parallel", "arbitrary"),
            vmem_limit_bytes=int(budget),
        ),
    )(x2d, w1_t, b1_p, w2_t, b2_p)

    out = out[:m, :out_dim]
    return out.reshape(*orig_shape[:-1], out_dim)


if __name__ == "__main__":
    # Small, deterministic setup: batch=2, seq=8, d_model=32, hidden=64, out=32
    batch, seq, d_model = 2, 8, 32
    ffn_num_hiddens, ffn_num_outputs = 64, 32

    key = jax.random.PRNGKey(0)
    kx, kw1, kb1, kw2, kb2 = jax.random.split(key, 5)

    x = jax.random.normal(kx, (batch, seq, d_model), dtype=jnp.float32)
    # PyTorch Linear weight shape: (out_features, in_features)
    w1 = jax.random.normal(kw1, (ffn_num_hiddens, d_model), jnp.float32) * 0.1
    b1 = jax.random.normal(kb1, (ffn_num_hiddens,), jnp.float32) * 0.1
    w2 = jax.random.normal(kw2, (ffn_num_outputs, ffn_num_hiddens), jnp.float32) * 0.1
    b2 = jax.random.normal(kb2, (ffn_num_outputs,), jnp.float32) * 0.1

    # Reference in plain JAX (same math as the PyTorch module, fp32).
    ref = jnp.maximum(x @ w1.T + b1, 0.0) @ w2.T + b2

    # 1) fp32 compute mode: bit-accuracy check of the fused kernel structure.
    params32, out_dim = prepare_ffn_params(w1, b1, w2, b2,
                                           compute_dtype=jnp.float32)
    y32 = position_wise_ffn(x, *params32, out_dim=out_dim)
    jax.block_until_ready(y32)
    assert y32.shape == (batch, seq, ffn_num_outputs)
    assert jnp.allclose(y32, ref, atol=1e-5, rtol=1e-5)

    # 2) Default performance mode: bf16 MXU operands, fp32 accumulation.
    params_bf16, out_dim = prepare_ffn_params(w1, b1, w2, b2)
    y = position_wise_ffn(x, *params_bf16, out_dim=out_dim)
    jax.block_until_ready(y)
    assert y.shape == (batch, seq, ffn_num_outputs)
    assert jnp.allclose(y.astype(jnp.float32), ref, atol=5e-2, rtol=5e-2)

    print("KERNEL_OK")
</pallas_src>

<mosaic_0001>
module attributes {stable_mosaic.version = 11 : i64} {
  func.func @_ffn_kernel(%arg0: i32, %arg1: i32, %arg2: i32, %arg3: memref<16x128xf32, #tpu.memory_space<vmem>>, %arg4: memref<128x128xf32, #tpu.memory_space<vmem>>, %arg5: memref<1x128xf32, #tpu.memory_space<vmem>>, %arg6: memref<128x128xf32, #tpu.memory_space<vmem>>, %arg7: memref<1x128xf32, #tpu.memory_space<vmem>>, %arg8: memref<16x128xf32, #tpu.memory_space<vmem>>, %arg9: memref<16x128xf32, #tpu.memory_space<vmem>>) attributes {dimension_semantics = [#tpu.dimension_semantics<parallel>, #tpu.dimension_semantics<parallel>, #tpu.dimension_semantics<arbitrary>], iteration_bounds = array<i64: 1, 1, 1>, scalar_prefetch = 0 : i64, scratch_operands = 1 : i64, tpu.core_type = #tpu.core_type<tc>, window_params = [{transform_indices = @transform_0, window_bounds = array<i64: 16, 128>}, {transform_indices = @transform_1, window_bounds = array<i64: 128, 128>}, {pipeline_mode = #tpu.pipeline_mode<synchronous>, transform_indices = @transform_2, window_bounds = array<i64: 1, 128>}, {transform_indices = @transform_3, window_bounds = array<i64: 128, 128>}, {pipeline_mode = #tpu.pipeline_mode<synchronous>, transform_indices = @transform_4, window_bounds = array<i64: 1, 128>}, {transform_indices = @transform_5, window_bounds = array<i64: 16, 128>}]} {
    %c0_i32 = arith.constant 0 : i32
    %0 = arith.cmpi eq, %arg2, %c0_i32 : i32
    %1 = arith.extui %0 : i1 to i32
    %c0_i32_0 = arith.constant 0 : i32
    %2 = arith.cmpi ne, %1, %c0_i32_0 : i32
    scf.if %2 {
      %cst_15 = arith.constant 0.000000e+00 : f32
      %22 = vector.broadcast %cst_15 : f32 to vector<16x128xf32>
      %c0_16 = arith.constant 0 : index
      %c0_17 = arith.constant 0 : index
      %23 = vector.load %arg9[%c0_16, %c0_17] : memref<16x128xf32, #tpu.memory_space<vmem>>, vector<16x128xf32>
      tpu.vector_store %arg9[%c0_16, %c0_17], %22 {strides = array<i32>} : memref<16x128xf32, #tpu.memory_space<vmem>>, vector<16x128xf32>,
    } else {
    }
    %c128_i32 = arith.constant 128 : i32
    %3 = arith.muli %arg2, %c128_i32 : i32
    %4 = tpu.assume_multiple %3, 128 : i32
    %c0 = arith.constant 0 : index
    %5 = arith.index_cast %4 : i32 to index
    %6 = vector.load %arg5[%c0, %5] : memref<1x128xf32, #tpu.memory_space<vmem>>, vector<1x128xf32>
    %c0_1 = arith.constant 0 : index
    %c0_2 = arith.constant 0 : index
    %7 = vector.load %arg3[%c0_1, %c0_2] : memref<16x128xf32, #tpu.memory_space<vmem>>, vector<16x128xf32>
    %c0_3 = arith.constant 0 : index
    %c0_4 = arith.constant 0 : index
    %8 = vector.load %arg4[%c0_3, %c0_4] : memref<128x128xf32, #tpu.memory_space<vmem>>, vector<128x128xf32>
    %cst = arith.constant dense<0.000000e+00> : vector<16x128xf32>
    %9 = tpu.matmul %7, %8, %cst {dimension_numbers = #tpu.dot_dimension_numbers<[1], [0], [0], [1], [0, 0, 1, 1], [], []>} : vector<16x128xf32>, vector<128x128xf32>, vector<16x128xf32> -> vector<16x128xf32>
    %10 = vector.broadcast %6 : vector<1x128xf32> to vector<16x128xf32>
    %11 = arith.addf %9, %10 : vector<16x128xf32>
    %cst_5 = arith.constant 0.000000e+00 : f32
    %12 = vector.broadcast %cst_5 : f32 to vector<16x128xf32>
    %13 = arith.maximumf %11, %12 : vector<16x128xf32>
    %c0_6 = arith.constant 0 : index
    %c0_7 = arith.constant 0 : index
    %14 = vector.load %arg9[%c0_6, %c0_7] : memref<16x128xf32, #tpu.memory_space<vmem>>, vector<16x128xf32>
    %c0_8 = arith.constant 0 : index
    %c0_9 = arith.constant 0 : index
    %15 = vector.load %arg6[%c0_8, %c0_9] : memref<128x128xf32, #tpu.memory_space<vmem>>, vector<128x128xf32>
    %cst_10 = arith.constant dense<0.000000e+00> : vector<16x128xf32>
    %16 = tpu.matmul %13, %15, %cst_10 {dimension_numbers = #tpu.dot_dimension_numbers<[1], [0], [0], [1], [0, 0, 1, 1], [], []>} : vector<16x128xf32>, vector<128x128xf32>, vector<16x128xf32> -> vector<16x128xf32>
    %17 = arith.addf %14, %16 : vector<16x128xf32>
    %c0_11 = arith.constant 0 : index
    %c0_12 = arith.constant 0 : index
    %18 = vector.load %arg9[%c0_11, %c0_12] : memref<16x128xf32, #tpu.memory_space<vmem>>, vector<16x128xf32>
    tpu.vector_store %arg9[%c0_11, %c0_12], %17 {strides = array<i32>} : memref<16x128xf32, #tpu.memory_space<vmem>>, vector<16x128xf32>,
    %c0_i32_13 = arith.constant 0 : i32
    %19 = arith.cmpi eq, %arg2, %c0_i32_13 : i32
    %20 = arith.extui %19 : i1 to i32
    %c0_i32_14 = arith.constant 0 : i32
    %21 = arith.cmpi ne, %20, %c0_i32_14 : i32
    scf.if %21 {
      %c128_i32_15 = arith.constant 128 : i32
      %22 = arith.muli %arg1, %c128_i32_15 : i32
      %23 = tpu.assume_multiple %22, 128 : i32
      %c0_16 = arith.constant 0 : index
      %24 = arith.index_cast %23 : i32 to index
      %25 = vector.load %arg7[%c0_16, %24] : memref<1x128xf32, #tpu.memory_space<vmem>>, vector<1x128xf32>
      %c0_17 = arith.constant 0 : index
      %c0_18 = arith.constant 0 : index
      %26 = vector.load %arg9[%c0_17, %c0_18] : memref<16x128xf32, #tpu.memory_space<vmem>>, vector<16x128xf32>
      %27 = vector.broadcast %25 : vector<1x128xf32> to vector<16x128xf32>
      %28 = arith.addf %26, %27 : vector<16x128xf32>
      %c0_19 = arith.constant 0 : index
      %c0_20 = arith.constant 0 : index
      %29 = vector.load %arg8[%c0_19, %c0_20] : memref<16x128xf32, #tpu.memory_space<vmem>>, vector<16x128xf32>
      tpu.vector_store %arg8[%c0_19, %c0_20], %28 {strides = array<i32>} : memref<16x128xf32, #tpu.memory_space<vmem>>, vector<16x128xf32>,
    } else {
    }
    return
  }
  func.func @transform_0(%arg0: i32, %arg1: i32, %arg2: i32) -> (i32, i32) {
    %c0_i32 = arith.constant 0 : i32
    %c0_i32_0 = arith.constant 0 : i32
    return %arg0, %c0_i32 : i32, i32
  }
  func.func @transform_1(%arg0: i32, %arg1: i32, %arg2: i32) -> (i32, i32) {
    %c0_i32 = arith.constant 0 : i32
    %c0_i32_0 = arith.constant 0 : i32
    return %c0_i32, %arg2 : i32, i32
  }
  func.func @transform_2(%arg0: i32, %arg1: i32, %arg2: i32) -> (i32, i32) {
    %c0_i32 = arith.constant 0 : i32
    %c0_i32_0 = arith.constant 0 : i32
    %c0_i32_1 = arith.constant 0 : i32
    return %c0_i32, %c0_i32_0 : i32, i32
  }
  func.func @transform_3(%arg0: i32, %arg1: i32, %arg2: i32) -> (i32, i32) {
    %c0_i32 = arith.constant 0 : i32
    return %arg2, %arg1 : i32, i32
  }
  func.func @transform_4(%arg0: i32, %arg1: i32, %arg2: i32) -> (i32, i32) {
    %c0_i32 = arith.constant 0 : i32
    %c0_i32_0 = arith.constant 0 : i32
    %c0_i32_1 = arith.constant 0 : i32
    return %c0_i32, %c0_i32_0 : i32, i32
  }
  func.func @transform_5(%arg0: i32, %arg1: i32, %arg2: i32) -> (i32, i32) {
    %c0_i32 = arith.constant 0 : i32
    return %arg0, %arg1 : i32, i32
  }
}

</mosaic_0001>

<llo_original>
// kernel: position_wise_ffn.1
$region0: #{position_wise_ffn.1}
  #allocation0 [shape = 'u32[]', space=smem, size = 0x4, offset = 0x4, fixed_abs, tag = 'smem constant byte address 0x4 - core index']
  #allocation1 [shape = 'u32[72,128]{1,0:T(1,128)}', space=vmem, size = 0x9000, scoped, tag = 'internal scratch']
  #allocation2 [shape = 'f32[16,128]{1,0:T(8,128)}', space=vmem, size = 0x2000, scoped, tag = 'scratch operand']
  %s0 = inlined_call_operand.vmem [shape: f32[16,128], index: 0, kind: input, shape index: {}]
  %s1 = inlined_call_operand.hbm [shape: f32[128,128], index: 1, kind: input, shape index: {}]
  %s2 = inlined_call_operand.vmem [shape: f32[1,128], index: 2, kind: input, shape index: {}]
  %s3 = inlined_call_operand.hbm [shape: f32[128,128], index: 3, kind: input, shape index: {}]
  %s4 = inlined_call_operand.vmem [shape: f32[1,128], index: 4, kind: input, shape index: {}]
  %s5 = inlined_call_operand.vmem [shape: f32[16,128], index: 5, kind: output, shape index: {}]
  %s6 = sld [smem:[#allocation0]]
  $region46: #{position_wise_ffn.1} parent=0
    _
  %s8 = ssub.s32 1, %s6
  %s9 = scalar_select 0, %s8, %s6
  $region1: #{position_wise_ffn.1} parent=0
    #allocation3 [shape = 'u8[65536]{0}', space=vmem, size = 0x10000, scoped, tag = 'input window, operand 1, single buffered']
    #allocation4 [shape = 's32[1]{0}', space=sflag, size = 0x4, scoped, tag = 'scoped memory for position_wise_ffn.1']
    #allocation5 [shape = 'u8[65536]{0}', space=vmem, size = 0x10000, scoped, tag = 'input window, operand 3, single buffered']
    #allocation6 [shape = 's32[1]{0}', space=sflag, size = 0x4, scoped, tag = 'scoped memory for position_wise_ffn.1']
    %10 = vsyncpa [#allocation4], 0
    %11 = vsyncpa [#allocation6], 0
    // Predicated region
    $region2: #{position_wise_ffn.1} parent=1 // pred_check
      _
    $region3: #{position_wise_ffn.1} parent=1 // pred_check_branch
      %13 = sbr.rel (0) target = $region5
    $region4: #{position_wise_ffn.1} parent=1 // pred_region
      _
    $region5: #{position_wise_ffn.1} parent=1 // pred_fallthru
      _
    // Predicated region
    $region6: #{position_wise_ffn.1} parent=1 // pred_check
      _
    $region7: #{position_wise_ffn.1} parent=1 // pred_check_branch
      %15 = sbr.rel (0) target = $region9
    $region8: #{position_wise_ffn.1} parent=1 // pred_region
      %17 = vsyncadd [#allocation4], 0
      %s18 = sshll.u32 %s1, 4
      %s19 = int_to_ptr.hbm [resolvable:$true] %s18
      %s20 = sshll.u32 [#allocation3], 4
      %s21 = int_to_ptr.vmem [resolvable:$true] %s20
      %26 = dma.hbm_to_vmem [thread:$0]  %s19, 2048, %s21, [#allocation4], 128, 128, 8
    $region9: #{position_wise_ffn.1} parent=1 // pred_fallthru
      _
    // Predicated region
    $region10: #{position_wise_ffn.1} parent=1 // pred_check
      _
    $region11: #{position_wise_ffn.1} parent=1 // pred_check_branch
      %28 = sbr.rel (0) target = $region13
    $region12: #{position_wise_ffn.1} parent=1 // pred_region
      _
    $region13: #{position_wise_ffn.1} parent=1 // pred_fallthru
      _
    // Predicated region
    $region14: #{position_wise_ffn.1} parent=1 // pred_check
      _
    $region15: #{position_wise_ffn.1} parent=1 // pred_check_branch
      %30 = sbr.rel (0) target = $region17
    $region16: #{position_wise_ffn.1} parent=1 // pred_region
      %32 = vsyncadd [#allocation6], 0
      %s33 = sshll.u32 %s3, 4
      %s34 = int_to_ptr.hbm [resolvable:$true] %s33
      %s35 = sshll.u32 [#allocation5], 4
      %s36 = int_to_ptr.vmem [resolvable:$true] %s35
      %41 = dma.hbm_to_vmem [thread:$0]  %s34, 2048, %s36, [#allocation6], 128, 128, 8
    $region17: #{position_wise_ffn.1} parent=1 // pred_fallthru
      _
    // Predicated region
    $region18: #{position_wise_ffn.1} parent=1 // pred_check
      _
    $region19: #{position_wise_ffn.1} parent=1 // pred_check_branch
      %43 = sbr.rel (0) target = $region21
    $region20: #{position_wise_ffn.1} parent=1 // pred_region
      _
    $region21: #{position_wise_ffn.1} parent=1 // pred_fallthru
      _
    // Predicated region
    $region22: #{position_wise_ffn.1} parent=1 // pred_check
      _
    $region23: #{position_wise_ffn.1} parent=1 // pred_check_branch
      %45 = sbr.rel (0) target = $region25
    $region24: #{position_wise_ffn.1} parent=1 // pred_region
      %47 = dma.done [#allocation4], 2048
    $region25: #{position_wise_ffn.1} parent=1 // pred_fallthru
      _
    // Predicated region
    $region26: #{position_wise_ffn.1} parent=1 // pred_check
      _
    $region27: #{position_wise_ffn.1} parent=1 // pred_check_branch
      %49 = sbr.rel (0) target = $region29
    $region28: #{position_wise_ffn.1} parent=1 // pred_region
      %51 = dma.done [#allocation6], 2048
    $region29: #{position_wise_ffn.1} parent=1 // pred_fallthru
      _
    %p52 = scmp.eq.s32.totalorder 0, 0
    // Predicated region
    $region30: #{position_wise_ffn.1} parent=1 // pred_check
      %p53 = pneg %p52
    $region31: #{position_wise_ffn.1} parent=1 // pred_check_branch
      %55 = sbr.rel (%p53) target = $region33
    $region32: #{position_wise_ffn.1} parent=1 // pred_region
      %56 = vst [vmem:[#allocation2] sm:$0xff] 0.0
      %57 = vst [vmem:[#allocation2 + $0x8] sm:$0xff] 0.0
    $region33: #{position_wise_ffn.1} parent=1 // pred_fallthru
      _
    %s58 = smul.u32 0, 128
    %s59 = sshra.s32 %s58, 7
    %s60 = sand.u32 %s58, 127
    %s61 = scalar_lea.vmem %s2, %s59
    %v62 = vld [vmem:[%s61] sm:$0x1]
    %v63 = vld [vmem:[%s0] sm:$0xff]
    %v64 = vld [vmem:[%s0 + $0x8] sm:$0xff]
    %v65 = vld [vmem:[#allocation3] sm:$0xff]
    %v66 = vld [vmem:[#allocation3 + $0x8] sm:$0xff]
    %v67 = vld [vmem:[#allocation3 + $0x10] sm:$0xff]
    %v68 = vld [vmem:[#allocation3 + $0x18] sm:$0xff]
    %v69 = vld [vmem:[#allocation3 + $0x20] sm:$0xff]
    %v70 = vld [vmem:[#allocation3 + $0x28] sm:$0xff]
    %v71 = vld [vmem:[#allocation3 + $0x30] sm:$0xff]
    %v72 = vld [vmem:[#allocation3 + $0x38] sm:$0xff]
    %v73 = vld [vmem:[#allocation3 + $0x40] sm:$0xff]
    %v74 = vld [vmem:[#allocation3 + $0x48] sm:$0xff]
    %v75 = vld [vmem:[#allocation3 + $0x50] sm:$0xff]
    %v76 = vld [vmem:[#allocation3 + $0x58] sm:$0xff]
    %v77 = vld [vmem:[#allocation3 + $0x60] sm:$0xff]
    %v78 = vld [vmem:[#allocation3 + $0x68] sm:$0xff]
    %v79 = vld [vmem:[#allocation3 + $0x70] sm:$0xff]
    %v80 = vld [vmem:[#allocation3 + $0x78] sm:$0xff]
    %v82 = vperm.slane %v62, 0
    %84 = vmatpush.msra.mxu0 %v80
    %85 = vmatpush.msra.mxu0 %v79
    %86 = vmatpush.msra.mxu0 %v78
    %87 = vmatpush.msra.mxu0 %v77
    %88 = vmatpush.msra.mxu0 %v76
    %89 = vmatpush.msra.mxu0 %v75
    %90 = vmatpush.msra.mxu0 %v74
    %91 = vmatpush.msra.mxu0 %v73
    %92 = vmatpush.msra.mxu0 %v72
    %93 = vmatpush.msra.mxu0 %v71
    %94 = vmatpush.msra.mxu0 %v70
    %95 = vmatpush.msra.mxu0 %v69
    %96 = vmatpush.msra.mxu0 %v68
    %97 = vmatpush.msra.mxu0 %v67
    %98 = vmatpush.msra.mxu0 %v66
    %99 = vmatpush.msra.mxu0 %v65
    %100 = vmatmul.f32.gmra.mxu0 %v63
    %v101 = vpop.f32.mrf.mxu0
    %v102 = vadd.f32 %v82, %v101
    %103 = vmatmul.f32.gmra.mxu0 %v64
    %v104 = vpop.f32.mrf.mxu0
    %v105 = vadd.f32 %v82, %v104
    %106 = vdwg.mxu0
    %v107 = vmax.f32 %v102, 0.0
    %v108 = vmax.f32 %v105, 0.0
    %v109 = vld [vmem:[#allocation2] sm:$0xff]
    %v110 = vld [vmem:[#allocation2 + $0x8] sm:$0xff]
    %v111 = vld [vmem:[#allocation5] sm:$0xff]
    %v112 = vld [vmem:[#allocation5 + $0x8] sm:$0xff]
    %v113 = vld [vmem:[#allocation5 + $0x10] sm:$0xff]
    %v114 = vld [vmem:[#allocation5 + $0x18] sm:$0xff]
    %v115 = vld [vmem:[#allocation5 + $0x20] sm:$0xff]
    %v116 = vld [vmem:[#allocation5 + $0x28] sm:$0xff]
    %v117 = vld [vmem:[#allocation5 + $0x30] sm:$0xff]
    %v118 = vld [vmem:[#allocation5 + $0x38] sm:$0xff]
    %v119 = vld [vmem:[#allocation5 + $0x40] sm:$0xff]
    %v120 = vld [vmem:[#allocation5 + $0x48] sm:$0xff]
    %v121 = vld [vmem:[#allocation5 + $0x50] sm:$0xff]
    %v122 = vld [vmem:[#allocation5 + $0x58] sm:$0xff]
    %v123 = vld [vmem:[#allocation5 + $0x60] sm:$0xff]
    %v124 = vld [vmem:[#allocation5 + $0x68] sm:$0xff]
    %v125 = vld [vmem:[#allocation5 + $0x70] sm:$0xff]
    %v126 = vld [vmem:[#allocation5 + $0x78] sm:$0xff]
    %127 = vmatpush.msra.mxu0 %v126
    %128 = vmatpush.msra.mxu0 %v125
    %129 = vmatpush.msra.mxu0 %v124
    %130 = vmatpush.msra.mxu0 %v123
    %131 = vmatpush.msra.mxu0 %v122
    %132 = vmatpush.msra.mxu0 %v121
    %133 = vmatpush.msra.mxu0 %v120
    %134 = vmatpush.msra.mxu0 %v119
    %135 = vmatpush.msra.mxu0 %v118
    %136 = vmatpush.msra.mxu0 %v117
    %137 = vmatpush.msra.mxu0 %v116
    %138 = vmatpush.msra.mxu0 %v115
    %139 = vmatpush.msra.mxu0 %v114
    %140 = vmatpush.msra.mxu0 %v113
    %141 = vmatpush.msra.mxu0 %v112
    %142 = vmatpush.msra.mxu0 %v111
    %143 = vmatmul.f32.gmra.mxu0 %v107
    %v144 = vpop.f32.mrf.mxu0
    %v145 = vadd.f32 0.0, %v144
    %146 = vmatmul.f32.gmra.mxu0 %v108
    %v147 = vpop.f32.mrf.mxu0
    %v148 = vadd.f32 0.0, %v147
    %149 = vdwg.mxu0
    %v150 = vadd.f32 %v109, %v145
    %v151 = vadd.f32 %v110, %v148
    %152 = vst [vmem:[#allocation2] sm:$0xff] %v150
    %153 = vst [vmem:[#allocation2 + $0x8] sm:$0xff] %v151
    // Predicated region
    $region34: #{position_wise_ffn.1} parent=1 // pred_check
      %p154 = pneg %p52
    $region35: #{position_wise_ffn.1} parent=1 // pred_check_branch
      %156 = sbr.rel (%p154) target = $region37
    $region36: #{position_wise_ffn.1} parent=1 // pred_region
      %s157 = smul.u32 0, 128
      %s158 = sshra.s32 %s157, 7
      %s159 = sand.u32 %s157, 127
      %s160 = scalar_lea.vmem %s4, %s158
      %v161 = vld [vmem:[%s160] sm:$0x1]
      %v162 = vld [vmem:[#allocation2] sm:$0xff]
      %v163 = vld [vmem:[#allocation2 + $0x8] sm:$0xff]
      %v165 = vperm.slane %v161, 0
      %v167 = vadd.f32 %v162, %v165
      %v168 = vadd.f32 %v163, %v165
      %169 = vst [vmem:[%s5] sm:$0xff] %v167
      %170 = vst [vmem:[%s5 + $0x8] sm:$0xff] %v168
    $region37: #{position_wise_ffn.1} parent=1 // pred_fallthru
      _
    // Predicated region
    $region38: #{position_wise_ffn.1} parent=1 // pred_check
      _
    $region39: #{position_wise_ffn.1} parent=1 // pred_check_branch
      %172 = sbr.rel (0) target = $region41
    $region40: #{position_wise_ffn.1} parent=1 // pred_region
      _
    $region41: #{position_wise_ffn.1} parent=1 // pred_fallthru
      _
    // Predicated region
    $region42: #{position_wise_ffn.1} parent=1 // pred_check
      _
    $region43: #{position_wise_ffn.1} parent=1 // pred_check_branch
      %174 = sbr.rel (0) target = $region45
    $region44: #{position_wise_ffn.1} parent=1 // pred_region
      _
    $region45: #{position_wise_ffn.1} parent=1 // pred_fallthru
      _
    %175 = vsyncpa [#allocation4], 1
    %176 = vsyncpa [#allocation6], 1

</llo_original>
